<compile_context>
chip_gen: v6e
topology: v6e:2x2x1
jax: 0.10.0
libtpu: 0.0.40
codegen_flags: <defaults>
</compile_context>

<pallas_src>
import jax
import jax.numpy as jnp
from jax import lax
from jax.experimental import pallas as pl
from jax.experimental.pallas import tpu as pltpu


def _round_up(v, m):
    return (v + m - 1) // m * m


def _tpu_config():
    """Returns (softmax_bf16, prefer_multi_step, vmem_capacity_bytes) for the local chip."""
    kind = ""
    try:
        kind = (jax.devices()[0].device_kind or "").lower()
    except Exception:
        pass
    vmem_cap = None
    try:
        vmem_cap = int(getattr(pltpu.get_tpu_info(), "vmem_capacity_bytes", 0)) or None
    except Exception:
        vmem_cap = None
    is_v7 = ("v7" in kind) or ("7x" in kind)
    if vmem_cap is None:
        if is_v7:
            vmem_cap = 64 << 20            # v7x: 64 MiB VMEM per TensorCore
        elif any(s in kind for s in ("v4", "v5", "v6")):
            vmem_cap = 128 << 20
        else:
            vmem_cap = 64 << 20            # conservative default for unknown chips
    softmax_bf16 = ("v6" in kind) or is_v7  # bf16 VPU/EUP only on v6e / v7x
    prefer_multi_step = is_v7               # 2 TensorCores -> keep >= 2 parallel grid steps
    return softmax_bf16, prefer_multi_step, vmem_cap


def _pick_q_tile(N):
    if N <= 256:
        return N
    for t in (256, 128, 64, 32, 16, 8):
        if N % t == 0:
            return t
    return N


def _step_vmem_bytes(block_b, C, N, R, QP, VP, q_tile, softmax_bf16):
    """Rough per-grid-step VMEM footprint (bytes) used for block sizing and the vmem limit."""
    Lb = block_b * N
    sm = 2 if softmax_bf16 else 4
    io = 2 * 2 * (C * Lb * 4)                       # x + out blocks, double-buffered, f32
    weights = 2 * (R * C * 2 + R * 4)               # fused W (bf16) + bias (f32), x2 buffers
    fused = R * Lb * (2 if softmax_bf16 else 4)     # fused projection slab
    per_batch = (2 * QP + VP) * N * 2 + C * N * 4   # bf16 q/k/v slabs + x slice
    per_tile = q_tile * N * (4 + sm) + VP * q_tile * 4 + 2 * C * q_tile * 4
    result = C * Lb * 4                             # assembled output slab before the store
    return io + weights + fused + per_batch + per_tile + result + (1 << 20)


def _pick_block_b(B, N, step_bytes_fn, vmem_budget, prefer_multi_step):
    # Legal block_b: divides B and gives a 128-lane-dense block (or spans the full array).
    cands = [d for d in range(1, B + 1)
             if B % d == 0 and (d == B or (d * N) % 128 == 0)]
    fitting = [d for d in cands if step_bytes_fn(d) <= vmem_budget]
    if not fitting:
        return min(cands)          # smallest legal block; may still be tight for huge C*N
    if prefer_multi_step:          # v7x megacore: keep >= 2 grid steps when possible
        multi = [d for d in fitting if B // d >= 2]
        if multi:
            return max(multi)
    return max(fitting)            # single-TC chips (v5e/v6e): fewest grid steps that fit


def _make_attention_kernel(C, N, QP, VP, R, block_b, q_tile, softmax_bf16):
    v_start = 2 * QP
    n_q_tiles = N // q_tile
    fused_dtype = jnp.bfloat16 if softmax_bf16 else jnp.float32

    def kernel(x_ref, w_ref, b_ref, gamma_ref, o_ref):
        x = x_ref[...]                                    # (C, block_b*N) f32
        xb = x.astype(jnp.bfloat16)

        # Fused q/k/v/ones projection: ONE lane-dense 2-D MXU matmul for the whole block.
        # Bias add in f32 (v5e-safe); result kept in bf16 on v6e/v7x (all consumers are MXU).
        fused = lax.dot_general(w_ref[...], xb, (((1,), (0,)), ((), ())),
                                preferred_element_type=jnp.float32)
        fused = (fused + b_ref[...]).astype(fused_dtype)  # (R, block_b*N)

        gamma = gamma_ref[0]
        out_cols = []
        for bb in range(block_b):                         # static unroll; block_b is small
            c0 = bb * N
            q_b = fused[0:QP, c0:c0 + N].astype(jnp.bfloat16)                  # (QP, N)
            k_b = fused[QP:2 * QP, c0:c0 + N].astype(jnp.bfloat16)             # (QP, N)
            v_b = fused[v_start:v_start + VP, c0:c0 + N].astype(jnp.bfloat16)  # (VP, N)
            # v_b row C is exactly 1.0 (zero weight row + bias 1): the PV matmul below then
            # produces the unnormalized output AND the softmax denominator in one MXU pass.

            for t in range(n_q_tiles):                    # q-tiled softmax, k/v resident
                q0 = t * q_tile
                q_t = q_b[:, q0:q0 + q_tile]              # (QP, q_tile)
                # energy[i, j] = <q[:, i], k[:, j]>; zero-padded q/k rows contribute 0.
                e = lax.dot_general(q_t, k_b, (((0,), (0,)), ((), ())),
                                    preferred_element_type=jnp.float32)    # (q_tile, N)
                if softmax_bf16:                          # bf16 EUP/VPU on v6e/v7x
                    e = e.astype(jnp.bfloat16)
                m = jnp.max(e, axis=-1, keepdims=True)
                p = jnp.exp(e - m)                        # unnormalized probabilities
                p_mxu = p if softmax_bf16 else p.astype(jnp.bfloat16)
                # pv rows [0:C): sum_j v[c, j] * p[i, j];  pv row C: sum_j p[i, j] (denom).
                pv = lax.dot_general(v_b, p_mxu, (((1,), (1,)), ((), ())),
                                     preferred_element_type=jnp.float32)   # (VP, q_tile)
                inv = pl.reciprocal(pv[C:C + 1, :], approx=True)           # (1, q_tile), lane-oriented
                x_t = x[:, c0 + q0:c0 + q0 + q_tile]                       # (C, q_tile) f32
                out_cols.append(gamma * (pv[0:C, :] * inv) + x_t)          # residual in f32

        res = out_cols[0] if len(out_cols) == 1 else jnp.concatenate(out_cols, axis=1)
        o_ref[...] = res.astype(o_ref.dtype)              # single lane-dense store

    return kernel


def attention_forward(x_nchw, wq, bq, wk, bk, wv, bv, gamma, *, block_b=None, q_tile=None):
    """x_nchw: (B, C, W, H) f32.  wq/wk: (C//8, C), wv: (C, C) (squeezed 1x1-conv weights)."""
    B, C, W, H = x_nchw.shape
    N = W * H
    C8 = wq.shape[0]
    assert wq.shape == (C8, C) and wk.shape == (C8, C) and wv.shape == (C, C)

    QP = _round_up(max(C8, 1), 8)        # q/k row blocks padded to a sublane multiple
    VP = _round_up(C + 1, 8)             # v rows + 1 all-ones row (softmax denominator)
    R = 2 * QP + VP

    # Fused zero-padded projection weight/bias; row layout: [q|pad, k|pad, v, ones, pad].
    w_f = jnp.zeros((R, C), jnp.float32)
    w_f = w_f.at[0:C8].set(wq.astype(jnp.float32))
    w_f = w_f.at[QP:QP + C8].set(wk.astype(jnp.float32))
    w_f = w_f.at[2 * QP:2 * QP + C].set(wv.astype(jnp.float32))
    b_f = jnp.zeros((R, 1), jnp.float32)
    b_f = b_f.at[0:C8, 0].set(bq.astype(jnp.float32))
    b_f = b_f.at[QP:QP + C8, 0].set(bk.astype(jnp.float32))
    b_f = b_f.at[2 * QP:2 * QP + C, 0].set(bv.astype(jnp.float32))
    b_f = b_f.at[2 * QP + C, 0].set(1.0)                  # the ones-row (denominator)
    w_f = w_f.astype(jnp.bfloat16)                        # bf16 MXU operand (halves weight DMA)

    gamma1 = jnp.reshape(gamma, (1,)).astype(jnp.float32)

    softmax_bf16, prefer_multi_step, vmem_cap = _tpu_config()

    if q_tile is None:
        q_tile = _pick_q_tile(N)
    assert N % q_tile == 0

    def step_fn(bb):
        return _step_vmem_bytes(bb, C, N, R, QP, VP, q_tile, softmax_bf16)

    if block_b is None:
        block_b = _pick_block_b(B, N, step_fn, int(0.7 * vmem_cap), prefer_multi_step)
    assert B % block_b == 0
    assert block_b == B or (block_b * N) % 128 == 0, "block must be 128-lane dense or full"
    Lb = block_b * N

    vmem_limit = int(min(vmem_cap, max(32 << 20, 2 * step_fn(block_b))))

    # Lane-dense presentation: (B, C, W, H) -> (C, B*N).  One cheap wrapper transpose; the
    # projection matmul and the output store are then >= 128 lanes wide even for the real
    # EBM placement (8x8 feature map, N = 64).
    x_cn = x_nchw.reshape(B, C, N).astype(jnp.float32).transpose(1, 0, 2).reshape(C, B * N)

    kernel = _make_attention_kernel(C, N, QP, VP, R, block_b, q_tile, softmax_bf16)

    out_cn = pl.pallas_call(
        kernel,
        out_shape=jax.ShapeDtypeStruct((C, B * N), jnp.float32),
        grid=(B // block_b,),
        in_specs=[
            pl.BlockSpec((C, Lb), lambda g: (0, g)),             # x block (f32)
            pl.BlockSpec((R, C), lambda g: (0, 0)),              # fused W (bf16)
            pl.BlockSpec((R, 1), lambda g: (0, 0)),              # fused bias (f32)
            pl.BlockSpec(memory_space=pltpu.MemorySpace.SMEM),   # gamma scalar
        ],
        out_specs=pl.BlockSpec((C, Lb), lambda g: (0, g)),
        compiler_params=pltpu.CompilerParams(
            dimension_semantics=("parallel",),
            vmem_limit_bytes=vmem_limit),
    )(x_cn, w_f, b_f, gamma1)

    # (C, B*N) -> NCHW.
    return out_cn.reshape(C, B, N).transpose(1, 0, 2).reshape(B, C, W, H)


def _reference(x_nchw, wq, bq, wk, bk, wv, bv, gamma):
    """Pure-JAX f32 reference mirroring the PyTorch Attention.forward exactly."""
    B, C, W, H = x_nchw.shape
    N = W * H
    xf = x_nchw.reshape(B, C, N)
    q = jnp.einsum('oc,bcn->bon', wq, xf) + bq[None, :, None]
    k = jnp.einsum('oc,bcn->bon', wk, xf) + bk[None, :, None]
    v = jnp.einsum('oc,bcn->bon', wv, xf) + bv[None, :, None]
    energy = jnp.einsum('bci,bcj->bij', q, k)
    attn = jax.nn.softmax(energy, axis=-1)
    out = jnp.einsum('bcj,bij->bci', v, attn).reshape(B, C, W, H)
    return gamma[0] * out + x_nchw


if __name__ == "__main__":
    # The actual EBM Attention placement with channel_multiplier=1: channels[8]=64, 8x8 map.
    B, C, W, H = 2, 64, 8, 8
    C8 = C // 8

    key = jax.random.PRNGKey(0)
    kx, kq, kbq, kk, kbk, kv, kbv = jax.random.split(key, 7)

    x = jax.random.normal(kx, (B, C, W, H), dtype=jnp.float32)

    # Synthetic parameters (shapes match nn.Conv2d(..., kernel_size=1) squeezed).
    wq = 0.1 * jax.random.normal(kq, (C8, C), dtype=jnp.float32)
    bq = 0.1 * jax.random.normal(kbq, (C8,), dtype=jnp.float32)
    wk = 0.1 * jax.random.normal(kk, (C8, C), dtype=jnp.float32)
    bk = 0.1 * jax.random.normal(kbk, (C8,), dtype=jnp.float32)
    wv = 0.1 * jax.random.normal(kv, (C, C), dtype=jnp.float32)
    bv = 0.1 * jax.random.normal(kbv, (C,), dtype=jnp.float32)

    # (a) gamma = 0, exactly as the module initializes it: output must equal x (f32 residual).
    gamma0 = jnp.zeros((1,), dtype=jnp.float32)
    out0 = jax.block_until_ready(attention_forward(x, wq, bq, wk, bk, wv, bv, gamma0))
    assert out0.shape == (B, C, W, H)
    assert jnp.allclose(out0, x, atol=1e-6, rtol=1e-6), "gamma=0 residual mismatch"

    # (b) non-zero gamma exercises the attention path; bf16 MXU operands (and bf16 softmax on
    #     v6e/v7x) => relaxed tolerance.
    gamma_nz = jnp.array([0.7], dtype=jnp.float32)
    out1 = jax.block_until_ready(attention_forward(x, wq, bq, wk, bk, wv, bv, gamma_nz))
    ref1 = _reference(x, wq, bq, wk, bk, wv, bv, gamma_nz)
    max_err = float(jnp.max(jnp.abs(out1 - ref1)))
    assert jnp.allclose(out1, ref1, atol=5e-2, rtol=5e-2), (
        f"attention path mismatch vs reference (max abs err {max_err})")

    print("KERNEL_OK")
</pallas_src>

<mosaic_0001>
module attributes {stable_mosaic.version = 11 : i64} {
  func.func @kernel(%arg0: i32, %arg1: memref<64x128xf32, #tpu.memory_space<vmem>>, %arg2: memref<88x64xbf16, #tpu.memory_space<vmem>>, %arg3: memref<88x1xf32, #tpu.memory_space<vmem>>, %arg4: memref<1xf32, #tpu.memory_space<smem>>, %arg5: memref<64x128xf32, #tpu.memory_space<vmem>>) attributes {dimension_semantics = [#tpu.dimension_semantics<parallel>], iteration_bounds = array<i64: 1>, scalar_prefetch = 0 : i64, scratch_operands = 0 : i64, tpu.core_type = #tpu.core_type<tc>, window_params = [{transform_indices = @transform_0, window_bounds = array<i64: 64, 128>}, {pipeline_mode = #tpu.pipeline_mode<synchronous>, transform_indices = @transform_1, window_bounds = array<i64: 88, 64>}, {pipeline_mode = #tpu.pipeline_mode<synchronous>, transform_indices = @transform_2, window_bounds = array<i64: 88, 1>}, {transform_indices = @transform_3, window_bounds = array<i64: 1>}, {transform_indices = @transform_4, window_bounds = array<i64: 64, 128>}]} {
    %c0 = arith.constant 0 : index
    %c0_0 = arith.constant 0 : index
    %0 = vector.load %arg1[%c0, %c0_0] : memref<64x128xf32, #tpu.memory_space<vmem>>, vector<64x128xf32>
    %1 = arith.truncf %0 : vector<64x128xf32> to vector<64x128xbf16>
    %c0_1 = arith.constant 0 : index
    %c0_2 = arith.constant 0 : index
    %2 = vector.load %arg2[%c0_1, %c0_2] : memref<88x64xbf16, #tpu.memory_space<vmem>>, vector<88x64xbf16>
    %cst = arith.constant dense<0.000000e+00> : vector<88x128xf32>
    %3 = tpu.matmul %2, %1, %cst {dimension_numbers = #tpu.dot_dimension_numbers<[1], [0], [0], [1], [0, 0, 1, 1], [], []>} : vector<88x64xbf16>, vector<64x128xbf16>, vector<88x128xf32> -> vector<88x128xf32>
    %c0_3 = arith.constant 0 : index
    %c0_4 = arith.constant 0 : index
    %4 = vector.load %arg3[%c0_3, %c0_4] : memref<88x1xf32, #tpu.memory_space<vmem>>, vector<88x1xf32>
    %5 = vector.broadcast %4 : vector<88x1xf32> to vector<88x128xf32>
    %6 = arith.addf %3, %5 : vector<88x128xf32>
    %c0_5 = arith.constant 0 : index
    %7 = memref.load %arg4[%c0_5] : memref<1xf32, #tpu.memory_space<smem>>
    %8 = vector.extract_strided_slice %6 {offsets = [0, 0], sizes = [8, 64], strides = [1, 1]} : vector<88x128xf32> to vector<8x64xf32>
    %9 = arith.truncf %8 : vector<8x64xf32> to vector<8x64xbf16>
    %10 = vector.extract_strided_slice %6 {offsets = [8, 0], sizes = [8, 64], strides = [1, 1]} : vector<88x128xf32> to vector<8x64xf32>
    %11 = arith.truncf %10 : vector<8x64xf32> to vector<8x64xbf16>
    %12 = vector.extract_strided_slice %6 {offsets = [16, 0], sizes = [72, 64], strides = [1, 1]} : vector<88x128xf32> to vector<72x64xf32>
    %13 = arith.truncf %12 : vector<72x64xf32> to vector<72x64xbf16>
    %cst_6 = arith.constant dense<0.000000e+00> : vector<64x64xf32>
    %14 = tpu.matmul %9, %11, %cst_6 {dimension_numbers = #tpu.dot_dimension_numbers<[0], [0], [1], [1], [0, 1, 1, 1], [], []>} : vector<8x64xbf16>, vector<8x64xbf16>, vector<64x64xf32> -> vector<64x64xf32>
    %cst_7 = arith.constant dense<0xFF800000> : vector<64xf32>
    %15 = vector.multi_reduction <maximumf>, %14, %cst_7 [1] : vector<64x64xf32> to vector<64xf32>
    %16 = vector.shape_cast %15 : vector<64xf32> to vector<64x1xf32>
    %17 = vector.broadcast %16 : vector<64x1xf32> to vector<64x64xf32>
    %18 = arith.subf %14, %17 : vector<64x64xf32>
    %19 = math.exp %18 : vector<64x64xf32>
    %20 = arith.truncf %19 : vector<64x64xf32> to vector<64x64xbf16>
    %cst_8 = arith.constant dense<0.000000e+00> : vector<72x64xf32>
    %21 = tpu.matmul %13, %20, %cst_8 {dimension_numbers = #tpu.dot_dimension_numbers<[1], [1], [0], [0], [0, 0, 1, 0], [], []>} : vector<72x64xbf16>, vector<64x64xbf16>, vector<72x64xf32> -> vector<72x64xf32>
    %22 = vector.extract_strided_slice %21 {offsets = [64, 0], sizes = [1, 64], strides = [1, 1]} : vector<72x64xf32> to vector<1x64xf32>
    %23 = tpu.reciprocal %22 {approx = true} : vector<1x64xf32> -> vector<1x64xf32>
    %24 = vector.extract_strided_slice %0 {offsets = [0, 0], sizes = [64, 64], strides = [1, 1]} : vector<64x128xf32> to vector<64x64xf32>
    %25 = vector.extract_strided_slice %21 {offsets = [0, 0], sizes = [64, 64], strides = [1, 1]} : vector<72x64xf32> to vector<64x64xf32>
    %26 = vector.broadcast %23 : vector<1x64xf32> to vector<64x64xf32>
    %27 = arith.mulf %25, %26 : vector<64x64xf32>
    %28 = vector.broadcast %7 : f32 to vector<64x64xf32>
    %29 = arith.mulf %28, %27 : vector<64x64xf32>
    %30 = arith.addf %29, %24 : vector<64x64xf32>
    %31 = vector.extract_strided_slice %6 {offsets = [0, 64], sizes = [8, 64], strides = [1, 1]} : vector<88x128xf32> to vector<8x64xf32>
    %32 = arith.truncf %31 : vector<8x64xf32> to vector<8x64xbf16>
    %33 = vector.extract_strided_slice %6 {offsets = [8, 64], sizes = [8, 64], strides = [1, 1]} : vector<88x128xf32> to vector<8x64xf32>
    %34 = arith.truncf %33 : vector<8x64xf32> to vector<8x64xbf16>
    %35 = vector.extract_strided_slice %6 {offsets = [16, 64], sizes = [72, 64], strides = [1, 1]} : vector<88x128xf32> to vector<72x64xf32>
    %36 = arith.truncf %35 : vector<72x64xf32> to vector<72x64xbf16>
    %cst_9 = arith.constant dense<0.000000e+00> : vector<64x64xf32>
    %37 = tpu.matmul %32, %34, %cst_9 {dimension_numbers = #tpu.dot_dimension_numbers<[0], [0], [1], [1], [0, 1, 1, 1], [], []>} : vector<8x64xbf16>, vector<8x64xbf16>, vector<64x64xf32> -> vector<64x64xf32>
    %cst_10 = arith.constant dense<0xFF800000> : vector<64xf32>
    %38 = vector.multi_reduction <maximumf>, %37, %cst_10 [1] : vector<64x64xf32> to vector<64xf32>
    %39 = vector.shape_cast %38 : vector<64xf32> to vector<64x1xf32>
    %40 = vector.broadcast %39 : vector<64x1xf32> to vector<64x64xf32>
    %41 = arith.subf %37, %40 : vector<64x64xf32>
    %42 = math.exp %41 : vector<64x64xf32>
    %43 = arith.truncf %42 : vector<64x64xf32> to vector<64x64xbf16>
    %cst_11 = arith.constant dense<0.000000e+00> : vector<72x64xf32>
    %44 = tpu.matmul %36, %43, %cst_11 {dimension_numbers = #tpu.dot_dimension_numbers<[1], [1], [0], [0], [0, 0, 1, 0], [], []>} : vector<72x64xbf16>, vector<64x64xbf16>, vector<72x64xf32> -> vector<72x64xf32>
    %45 = vector.extract_strided_slice %44 {offsets = [64, 0], sizes = [1, 64], strides = [1, 1]} : vector<72x64xf32> to vector<1x64xf32>
    %46 = tpu.reciprocal %45 {approx = true} : vector<1x64xf32> -> vector<1x64xf32>
    %47 = vector.extract_strided_slice %0 {offsets = [0, 64], sizes = [64, 64], strides = [1, 1]} : vector<64x128xf32> to vector<64x64xf32>
    %48 = vector.extract_strided_slice %44 {offsets = [0, 0], sizes = [64, 64], strides = [1, 1]} : vector<72x64xf32> to vector<64x64xf32>
    %49 = vector.broadcast %46 : vector<1x64xf32> to vector<64x64xf32>
    %50 = arith.mulf %48, %49 : vector<64x64xf32>
    %51 = vector.broadcast %7 : f32 to vector<64x64xf32>
    %52 = arith.mulf %51, %50 : vector<64x64xf32>
    %53 = arith.addf %52, %47 : vector<64x64xf32>
    %54 = tpu.concatenate %30, %53 in 1 : vector<64x64xf32>, vector<64x64xf32> -> vector<64x128xf32>
    %c0_12 = arith.constant 0 : index
    %c0_13 = arith.constant 0 : index
    %55 = vector.load %arg5[%c0_12, %c0_13] : memref<64x128xf32, #tpu.memory_space<vmem>>, vector<64x128xf32>
    tpu.vector_store %arg5[%c0_12, %c0_13], %54 {strides = array<i32>} : memref<64x128xf32, #tpu.memory_space<vmem>>, vector<64x128xf32>,
    return
  }
  func.func @transform_0(%arg0: i32) -> (i32, i32) {
    %c0_i32 = arith.constant 0 : i32
    %c0_i32_0 = arith.constant 0 : i32
    return %c0_i32, %arg0 : i32, i32
  }
  func.func @transform_1(%arg0: i32) -> (i32, i32) {
    %c0_i32 = arith.constant 0 : i32
    %c0_i32_0 = arith.constant 0 : i32
    %c0_i32_1 = arith.constant 0 : i32
    return %c0_i32, %c0_i32_0 : i32, i32
  }
  func.func @transform_2(%arg0: i32) -> (i32, i32) {
    %c0_i32 = arith.constant 0 : i32
    %c0_i32_0 = arith.constant 0 : i32
    %c0_i32_1 = arith.constant 0 : i32
    return %c0_i32, %c0_i32_0 : i32, i32
  }
  func.func @transform_3(%arg0: i32) -> i32 {
    %c0_i32 = arith.constant 0 : i32
    %c0_i32_0 = arith.constant 0 : i32
    return %c0_i32 : i32
  }
  func.func @transform_4(%arg0: i32) -> (i32, i32) {
    %c0_i32 = arith.constant 0 : i32
    %c0_i32_0 = arith.constant 0 : i32
    return %c0_i32, %arg0 : i32, i32
  }
}

</mosaic_0001>

<llo_original>
// kernel: tpu_custom_call.1
$region0: #{tpu_custom_call.1}
  #allocation0 [shape = 'u32[]', space=smem, size = 0x4, offset = 0x4, fixed_abs, tag = 'smem constant byte address 0x4 - core index']
  #allocation1 [shape = 'u32[144,128]{1,0:T(1,128)}', space=vmem, size = 0x12000, scoped, tag = 'internal scratch']
  #allocation2 [shape = 'f32[1]{0:T(128)S(6)}', space=smem, size = 0x200, scoped, tag = 'scoped memory for tpu_custom_call.1']
  %s0 = inlined_call_operand.vmem [shape: f32[64,128], index: 0, kind: input, shape index: {}]
  %s1 = inlined_call_operand.vmem [shape: bf16[88,64], index: 1, kind: input, shape index: {}]
  %s2 = inlined_call_operand.vmem [shape: f32[88,1], index: 2, kind: input, shape index: {}]
  %s3 = inlined_call_operand.<no memory space> [shape: f32[1], index: 3, kind: input, shape index: {}]
  %s4 = inlined_call_operand.hbm [shape: f32[64,128], index: 4, kind: output, shape index: {}]
  %s5 = sld [smem:[#allocation0]]
  $region26: #{tpu_custom_call.1} parent=0
    _
  %s7 = ssub.s32 1, %s5
  %s8 = scalar_select 0, %s7, %s5
  %9 = sst [smem:[#allocation2]] %s3
  $region1: #{tpu_custom_call.1} parent=0
    #allocation3 [shape = 'u8[32768]{0}', space=vmem, size = 0x8000, scoped, tag = 'output window, operand 0, single buffered']
    #allocation4 [shape = 's32[1]{0}', space=sflag, size = 0x4, scoped, tag = 'scoped memory for tpu_custom_call.1']
    %10 = vsyncpa [#allocation4], 0
    // Predicated region
    $region2: #{tpu_custom_call.1} parent=1 // pred_check
      _
    $region3: #{tpu_custom_call.1} parent=1 // pred_check_branch
      %12 = sbr.rel (0) target = $region5
    $region4: #{tpu_custom_call.1} parent=1 // pred_region
      _
    $region5: #{tpu_custom_call.1} parent=1 // pred_fallthru
      _
    // Predicated region
    $region6: #{tpu_custom_call.1} parent=1 // pred_check
      _
    $region7: #{tpu_custom_call.1} parent=1 // pred_check_branch
      %14 = sbr.rel (0) target = $region9
    $region8: #{tpu_custom_call.1} parent=1 // pred_region
      _
    $region9: #{tpu_custom_call.1} parent=1 // pred_fallthru
      _
    // Predicated region
    $region10: #{tpu_custom_call.1} parent=1 // pred_check
      _
    $region11: #{tpu_custom_call.1} parent=1 // pred_check_branch
      %16 = sbr.rel (0) target = $region13
    $region12: #{tpu_custom_call.1} parent=1 // pred_region
      _
    $region13: #{tpu_custom_call.1} parent=1 // pred_fallthru
      _
    // Predicated region
    $region14: #{tpu_custom_call.1} parent=1 // pred_check
      _
    $region15: #{tpu_custom_call.1} parent=1 // pred_check_branch
      %18 = sbr.rel (0) target = $region17
    $region16: #{tpu_custom_call.1} parent=1 // pred_region
      _
    $region17: #{tpu_custom_call.1} parent=1 // pred_fallthru
      _
    %v20 = vld [vmem:[%s0] sm:$0xff]
    %v21 = vld [vmem:[%s0 + $0x8] sm:$0xff]
    %v22 = vld [vmem:[%s0 + $0x10] sm:$0xff]
    %v23 = vld [vmem:[%s0 + $0x18] sm:$0xff]
    %v24 = vld [vmem:[%s0 + $0x20] sm:$0xff]
    %v25 = vld [vmem:[%s0 + $0x28] sm:$0xff]
    %v26 = vld [vmem:[%s0 + $0x30] sm:$0xff]
    %v27 = vld [vmem:[%s0 + $0x38] sm:$0xff]
    %v28 = vpack.c.bf16 %v21, %v20
    %v29 = vpack.c.bf16 %v23, %v22
    %v30 = vpack.c.bf16 %v25, %v24
    %v31 = vpack.c.bf16 %v27, %v26
    %v32 = vld [vmem:[%s1] sm:$0xf]
    %v33 = vld [vmem:[%s1 + $0x4] sm:$0xf]
    %v34 = vld [vmem:[%s1 + $0x8] sm:$0xf]
    %v35 = vld [vmem:[%s1 + $0xc] sm:$0xf]
    %v36 = vld [vmem:[%s1 + $0x10] sm:$0xf]
    %v37 = vld [vmem:[%s1 + $0x14] sm:$0xf]
    %v38 = vld [vmem:[%s1 + $0x18] sm:$0xf]
    %v39 = vld [vmem:[%s1 + $0x1c] sm:$0xf]
    %v40 = vld [vmem:[%s1 + $0x20] sm:$0xf]
    %v41 = vld [vmem:[%s1 + $0x24] sm:$0xf]
    %v42 = vld [vmem:[%s1 + $0x28] sm:$0xf]
    %v43 = vld [vmem:[%s2] sm:$0xff]
    %v44 = vld [vmem:[%s2 + $0x8] sm:$0xff]
    %v45 = vld [vmem:[%s2 + $0x10] sm:$0xff]
    %v46 = vld [vmem:[%s2 + $0x18] sm:$0xff]
    %v47 = vld [vmem:[%s2 + $0x20] sm:$0xff]
    %v48 = vld [vmem:[%s2 + $0x28] sm:$0xff]
    %v49 = vld [vmem:[%s2 + $0x30] sm:$0xff]
    %v50 = vld [vmem:[%s2 + $0x38] sm:$0xff]
    %v51 = vld [vmem:[%s2 + $0x40] sm:$0xff]
    %v52 = vld [vmem:[%s2 + $0x48] sm:$0xff]
    %v53 = vld [vmem:[%s2 + $0x50] sm:$0xff]
    %55 = vset.pattern.permute.xlu0 0
    %56 = vperm.xlu0 %55, %v43
    %v57 = vpop.permute.xlu0 %56
    %60 = vset.pattern.permute.xlu0 0
    %61 = vperm.xlu0 %60, %v44
    %v62 = vpop.permute.xlu0 %61
    %65 = vset.pattern.permute.xlu0 0
    %66 = vperm.xlu0 %65, %v45
    %v67 = vpop.permute.xlu0 %66
    %70 = vset.pattern.permute.xlu0 0
    %71 = vperm.xlu0 %70, %v46
    %v72 = vpop.permute.xlu0 %71
    %75 = vset.pattern.permute.xlu0 0
    %76 = vperm.xlu0 %75, %v47
    %v77 = vpop.permute.xlu0 %76
    %80 = vset.pattern.permute.xlu0 0
    %81 = vperm.xlu0 %80, %v48
    %v82 = vpop.permute.xlu0 %81
    %85 = vset.pattern.permute.xlu0 0
    %86 = vperm.xlu0 %85, %v49
    %v87 = vpop.permute.xlu0 %86
    %90 = vset.pattern.permute.xlu0 0
    %91 = vperm.xlu0 %90, %v50
    %v92 = vpop.permute.xlu0 %91
    %95 = vset.pattern.permute.xlu0 0
    %96 = vperm.xlu0 %95, %v51
    %v97 = vpop.permute.xlu0 %96
    %100 = vset.pattern.permute.xlu0 0
    %101 = vperm.xlu0 %100, %v52
    %v102 = vpop.permute.xlu0 %101
    %105 = vset.pattern.permute.xlu0 0
    %106 = vperm.xlu0 %105, %v53
    %v107 = vpop.permute.xlu0 %106
    %v120 = vunpack.c.l.b16 %v32
    %v121 = vunpack.c.l.b16 %v33
    %v122 = vunpack.c.l.b16 %v34
    %v123 = vunpack.c.l.b16 %v35
    %v124 = vunpack.c.l.b16 %v36
    %v125 = vunpack.c.l.b16 %v37
    %v126 = vunpack.c.l.b16 %v38
    %v127 = vunpack.c.l.b16 %v39
    %v128 = vunpack.c.l.b16 %v40
    %v129 = vunpack.c.l.b16 %v41
    %v130 = vunpack.c.l.b16 %v42
    %v131 = vpack.c.b16 %v121, %v120
    %v132 = vpack.c.b16 %v123, %v122
    %v133 = vpack.c.b16 %v125, %v124
    %v134 = vpack.c.b16 %v127, %v126
    %v135 = vpack.c.b16 %v129, %v128
    %v136 = vpack.c.b16 %v130, %v130
    %vm137 = vcmask 523264
    %v139 = vsel %vm137, %v131, 0
    %v142 = vsel %vm137, %v132, 0
    %v145 = vsel %vm137, %v133, 0
    %v148 = vsel %vm137, %v134, 0
    %v151 = vsel %vm137, %v135, 0
    %v154 = vsel %vm137, %v136, 0
    %156 = vmatprep.subr.bf16.mxu0 0
    %157 = vmatpush1.bf16.msra.mxu0 0
    %158 = vmatprep.subr.bf16.mxu0 0
    %159 = vmatpush1.bf16.msra.mxu0 0
    %160 = vmatprep.subr.bf16.mxu0 0
    %161 = vmatpush1.bf16.msra.mxu0 0
    %162 = vmatprep.subr.bf16.mxu0 0
    %163 = vmatpush1.bf16.msra.mxu0 0
    %164 = vmatprep.subr.bf16.mxu0 0
    %165 = vmatpush1.bf16.msra.mxu0 %v31
    %166 = vmatprep.subr.bf16.mxu0 0
    %167 = vmatpush1.bf16.msra.mxu0 %v30
    %168 = vmatprep.subr.bf16.mxu0 0
    %169 = vmatpush1.bf16.msra.mxu0 %v29
    %170 = vmatprep.subr.bf16.mxu0 0
    %171 = vmatpush1.bf16.msra.mxu0 %v28
    %172 = vmatprep.subr.bf16.mxu0 0
    %173 = vmatpush2.bf16.msra.mxu0 0
    %174 = vmatprep.subr.bf16.mxu0 0
    %175 = vmatpush2.bf16.msra.mxu0 0
    %176 = vmatprep.subr.bf16.mxu0 0
    %177 = vmatpush2.bf16.msra.mxu0 0
    %178 = vmatprep.subr.bf16.mxu0 0
    %179 = vmatpush2.bf16.msra.mxu0 0
    %180 = vmatprep.subr.bf16.mxu0 0
    %181 = vmatpush2.bf16.msra.mxu0 0
    %182 = vmatprep.subr.bf16.mxu0 0
    %183 = vmatpush2.bf16.msra.mxu0 0
    %184 = vmatprep.subr.bf16.mxu0 0
    %185 = vmatpush2.bf16.msra.mxu0 0
    %186 = vmatprep.subr.bf16.mxu0 0
    %187 = vmatpush2.bf16.msra.mxu0 0
    %188 = vmatprep.mubr.bf16.mxu0 0
    %189 = vmatmul.mubr.bf16.gmra.mxu0 %v139
    %v190 = vpop.f32.mrf.mxu0
    %v191 = vadd.f32 %v57, %v190
    %v192 = vpop.f32.mrf.mxu0
    %v193 = vpop.f32.mrf.mxu0
    %v194 = vadd.f32 %v62, %v193
    %v195 = vpop.f32.mrf.mxu0
    %196 = vmatprep.mubr.bf16.mxu0 0
    %197 = vmatmul.mubr.bf16.gmra.mxu0 %v142
    %v198 = vpop.f32.mrf.mxu0
    %v199 = vadd.f32 %v67, %v198
    %v200 = vpop.f32.mrf.mxu0
    %v201 = vpop.f32.mrf.mxu0
    %v202 = vadd.f32 %v72, %v201
    %v203 = vpop.f32.mrf.mxu0
    %204 = vmatprep.mubr.bf16.mxu0 0
    %205 = vmatmul.mubr.bf16.gmra.mxu0 %v145
    %v206 = vpop.f32.mrf.mxu0
    %v207 = vadd.f32 %v77, %v206
    %v208 = vpop.f32.mrf.mxu0
    %v209 = vpop.f32.mrf.mxu0
    %v210 = vadd.f32 %v82, %v209
    %v211 = vpop.f32.mrf.mxu0
    %212 = vmatprep.mubr.bf16.mxu0 0
    %213 = vmatmul.mubr.bf16.gmra.mxu0 %v148
    %v214 = vpop.f32.mrf.mxu0
    %v215 = vadd.f32 %v87, %v214
    %v216 = vpop.f32.mrf.mxu0
    %v217 = vpop.f32.mrf.mxu0
    %v218 = vadd.f32 %v92, %v217
    %v219 = vpop.f32.mrf.mxu0
    %220 = vmatprep.mubr.bf16.mxu0 0
    %221 = vmatmul.mubr.bf16.gmra.mxu0 %v151
    %v222 = vpop.f32.mrf.mxu0
    %v223 = vadd.f32 %v97, %v222
    %v224 = vpop.f32.mrf.mxu0
    %v225 = vpop.f32.mrf.mxu0
    %v226 = vadd.f32 %v102, %v225
    %v227 = vpop.f32.mrf.mxu0
    %228 = vmatprep.mubr.bf16.mxu0 0
    %229 = vmatmul.mubr.bf16.gmra.mxu0 %v154
    %v230 = vpop.f32.mrf.mxu0
    %v231 = vadd.f32 %v107, %v230
    %v232 = vpop.f32.mrf.mxu0
    %v233 = vpop.f32.mrf.mxu0
    %v234 = vpop.f32.mrf.mxu0
    %235 = vdwg.mxu0
    %s236 = sld [smem:[#allocation2]]
    %v237 = vpack.c.bf16 %v191, %v191
    %v238 = vpack.c.bf16 %v194, %v194
    %v239 = vpack.c.bf16 %v202, %v199
    %v240 = vpack.c.bf16 %v210, %v207
    %v241 = vpack.c.bf16 %v218, %v215
    %v242 = vpack.c.bf16 %v226, %v223
    %v243 = vpack.c.bf16 %v231, %v231
    %244 = vxpose.xlu0.c.b16.start [1/8] %v237, 128
    %245 = vxpose.xlu0.c.b16.cont [2/8] 0, 128
    %246 = vxpose.xlu0.c.b16.cont [3/8] 0, 128
    %247 = vxpose.xlu0.c.b16.cont [4/8] 0, 128
    %248 = vxpose.xlu0.c.b16.cont [5/8] 0, 128
    %249 = vxpose.xlu0.c.b16.cont [6/8] 0, 128
    %250 = vxpose.xlu0.c.b16.cont [7/8] 0, 128
    %251 = vxpose.xlu0.c.b16.end [8/8] 0, 128
    %v252 = vpop.trf.xlu0
    %v253 = vpop.trf.xlu0
    %v254 = vpop.trf.xlu0
    %v255 = vpop.trf.xlu0
    %v256 = vpop.trf.xlu0
    %v257 = vpop.trf.xlu0
    %v258 = vpop.trf.xlu0
    %v259 = vpop.trf.xlu0
    %vm260 = vcmask 64512
    %v262 = vsel %vm260, %v252, 0
    %v265 = vsel %vm260, %v253, 0
    %v268 = vsel %vm260, %v254, 0
    %v271 = vsel %vm260, %v255, 0
    %vm273 = vcmask 1043456
    %v275 = vsel %vm273, %v238, 0
    %277 = vmatprep.subr.bf16.mxu0 0
    %278 = vmatpush1.bf16.msra.mxu0 0
    %279 = vmatprep.subr.bf16.mxu0 0
    %280 = vmatpush1.bf16.msra.mxu0 0
    %281 = vmatprep.subr.bf16.mxu0 0
    %282 = vmatpush1.bf16.msra.mxu0 0
    %283 = vmatprep.subr.bf16.mxu0 0
    %284 = vmatpush1.bf16.msra.mxu0 0
    %285 = vmatprep.subr.bf16.mxu0 0
    %286 = vmatpush1.bf16.msra.mxu0 0
    %287 = vmatprep.subr.bf16.mxu0 0
    %288 = vmatpush1.bf16.msra.mxu0 0
    %289 = vmatprep.subr.bf16.mxu0 0
    %290 = vmatpush1.bf16.msra.mxu0 0
    %291 = vmatprep.subr.bf16.mxu0 0
    %292 = vmatpush1.bf16.msra.mxu0 %v275
    %293 = vmatprep.subr.bf16.mxu0 0
    %294 = vmatpush2.bf16.msra.mxu0 0
    %295 = vmatprep.subr.bf16.mxu0 0
    %296 = vmatpush2.bf16.msra.mxu0 0
    %297 = vmatprep.subr.bf16.mxu0 0
    %298 = vmatpush2.bf16.msra.mxu0 0
    %299 = vmatprep.subr.bf16.mxu0 0
    %300 = vmatpush2.bf16.msra.mxu0 0
    %301 = vmatprep.subr.bf16.mxu0 0
    %302 = vmatpush2.bf16.msra.mxu0 0
    %303 = vmatprep.subr.bf16.mxu0 0
    %304 = vmatpush2.bf16.msra.mxu0 0
    %305 = vmatprep.subr.bf16.mxu0 0
    %306 = vmatpush2.bf16.msra.mxu0 0
    %307 = vmatprep.subr.bf16.mxu0 0
    %308 = vmatpush2.bf16.msra.mxu0 0
    %309 = vmatprep.mubr.bf16.mxu0 0
    %310 = vmatmul.mubr.bf16.gmra.mxu0 %v262
    %v311 = vpop.f32.mrf.mxu0
    %v312 = vadd.f32 0.0, %v311
    %v313 = vpop.f32.mrf.mxu0
    %v314 = vpop.f32.mrf.mxu0
    %v315 = vadd.f32 0.0, %v314
    %v316 = vpop.f32.mrf.mxu0
    %317 = vmatprep.mubr.bf16.mxu0 0
    %318 = vmatmul.mubr.bf16.gmra.mxu0 %v265
    %v319 = vpop.f32.mrf.mxu0
    %v320 = vadd.f32 0.0, %v319
    %v321 = vpop.f32.mrf.mxu0
    %v322 = vpop.f32.mrf.mxu0
    %v323 = vadd.f32 0.0, %v322
    %v324 = vpop.f32.mrf.mxu0
    %325 = vmatprep.mubr.bf16.mxu0 0
    %326 = vmatmul.mubr.bf16.gmra.mxu0 %v268
    %v327 = vpop.f32.mrf.mxu0
    %v328 = vadd.f32 0.0, %v327
    %v329 = vpop.f32.mrf.mxu0
    %v330 = vpop.f32.mrf.mxu0
    %v331 = vadd.f32 0.0, %v330
    %v332 = vpop.f32.mrf.mxu0
    %333 = vmatprep.mubr.bf16.mxu0 0
    %334 = vmatmul.mubr.bf16.gmra.mxu0 %v271
    %v335 = vpop.f32.mrf.mxu0
    %v336 = vadd.f32 0.0, %v335
    %v337 = vpop.f32.mrf.mxu0
    %v338 = vpop.f32.mrf.mxu0
    %v339 = vadd.f32 0.0, %v338
    %v340 = vpop.f32.mrf.mxu0
    %341 = vdwg.mxu0
    %v342 = vsel %vm137, %v312, -inf
    %343 = vmax.xlane.f32.xlu0 %v342
    %v344 = vpop.xlane.xlu0 %343
    %v345 = vsel %vm137, %v315, -inf
    %346 = vmax.xlane.f32.xlu0 %v345
    %v347 = vpop.xlane.xlu0 %346
    %v348 = vsel %vm137, %v320, -inf
    %349 = vmax.xlane.f32.xlu0 %v348
    %v350 = vpop.xlane.xlu0 %349
    %v351 = vsel %vm137, %v323, -inf
    %352 = vmax.xlane.f32.xlu0 %v351
    %v353 = vpop.xlane.xlu0 %352
    %v354 = vsel %vm137, %v328, -inf
    %355 = vmax.xlane.f32.xlu0 %v354
    %v356 = vpop.xlane.xlu0 %355
    %v357 = vsel %vm137, %v331, -inf
    %358 = vmax.xlane.f32.xlu0 %v357
    %v359 = vpop.xlane.xlu0 %358
    %v360 = vsel %vm137, %v336, -inf
    %361 = vmax.xlane.f32.xlu0 %v360
    %v362 = vpop.xlane.xlu0 %361
    %v363 = vsel %vm137, %v339, -inf
    %364 = vmax.xlane.f32.xlu0 %v363
    %v365 = vpop.xlane.xlu0 %364
    %v366 = vsub.f32 %v312, %v344
    %v367 = vsub.f32 %v315, %v347
    %v368 = vsub.f32 %v320, %v350
    %v369 = vsub.f32 %v323, %v353
    %v370 = vsub.f32 %v328, %v356
    %v371 = vsub.f32 %v331, %v359
    %v372 = vsub.f32 %v336, %v362
    %v373 = vsub.f32 %v339, %v365
    %v374 = vmul.f32 %v366, 1.442695
    %v375 = vpow.pop %v374
    %v376 = vmul.f32 %v367, 1.442695
    %v377 = vpow.pop %v376
    %v378 = vmul.f32 %v368, 1.442695
    %v379 = vpow.pop %v378
    %v380 = vmul.f32 %v369, 1.442695
    %v381 = vpow.pop %v380
    %v382 = vmul.f32 %v370, 1.442695
    %v383 = vpow.pop %v382
    %v384 = vmul.f32 %v371, 1.442695
    %v385 = vpow.pop %v384
    %v386 = vmul.f32 %v372, 1.442695
    %v387 = vpow.pop %v386
    %v388 = vmul.f32 %v373, 1.442695
    %v389 = vpow.pop %v388
    %v390 = vpack.c.bf16 %v377, %v375
    %v391 = vpack.c.bf16 %v381, %v379
    %v392 = vpack.c.bf16 %v385, %v383
    %v393 = vpack.c.bf16 %v389, %v387
    %v395 = vsel %vm137, %v239, 0
    %v398 = vsel %vm137, %v240, 0
    %v401 = vsel %vm137, %v241, 0
    %v404 = vsel %vm137, %v242, 0
    %v407 = vsel %vm137, %v243, 0
    %v410 = vsel %vm137, %v390, 0
    %v413 = vsel %vm137, %v391, 0
    %v416 = vsel %vm137, %v392, 0
    %v419 = vsel %vm137, %v393, 0
    %421 = vmatprep.subr.bf16.mxu0 0
    %422 = vmatpush1.bf16.xpose.msra.mxu0 0
    %423 = vmatprep.subr.bf16.mxu0 0
    %424 = vmatpush1.bf16.xpose.msra.mxu0 0
    %425 = vmatprep.subr.bf16.mxu0 0
    %426 = vmatpush1.bf16.xpose.msra.mxu0 0
    %427 = vmatprep.subr.bf16.mxu0 0
    %428 = vmatpush1.bf16.xpose.msra.mxu0 0
    %429 = vmatprep.subr.bf16.mxu0 0
    %430 = vmatpush1.bf16.xpose.msra.mxu0 %v419
    %431 = vmatprep.subr.bf16.mxu0 0
    %432 = vmatpush1.bf16.xpose.msra.mxu0 %v416
    %433 = vmatprep.subr.bf16.mxu0 0
    %434 = vmatpush1.bf16.xpose.msra.mxu0 %v413
    %435 = vmatprep.subr.bf16.mxu0 0
    %436 = vmatpush1.bf16.xpose.msra.mxu0 %v410
    %437 = vmatprep.subr.bf16.mxu0 0
    %438 = vmatpush2.bf16.xpose.msra.mxu0 0
    %439 = vmatprep.subr.bf16.mxu0 0
    %440 = vmatpush2.bf16.xpose.msra.mxu0 0
    %441 = vmatprep.subr.bf16.mxu0 0
    %442 = vmatpush2.bf16.xpose.msra.mxu0 0
    %443 = vmatprep.subr.bf16.mxu0 0
    %444 = vmatpush2.bf16.xpose.msra.mxu0 0
    %445 = vmatprep.subr.bf16.mxu0 0
    %446 = vmatpush2.bf16.xpose.msra.mxu0 0
    %447 = vmatprep.subr.bf16.mxu0 0
    %448 = vmatpush2.bf16.xpose.msra.mxu0 0
    %449 = vmatprep.subr.bf16.mxu0 0
    %450 = vmatpush2.bf16.xpose.msra.mxu0 0
    %451 = vmatprep.subr.bf16.mxu0 0
    %452 = vmatpush2.bf16.xpose.msra.mxu0 0
    %453 = vmatprep.mubr.bf16.mxu0 0
    %454 = vmatmul.mubr.bf16.gmra.mxu0 %v395
    %v455 = vpop.f32.mrf.mxu0
    %v456 = vadd.f32 0.0, %v455
    %v457 = vpop.f32.mrf.mxu0
    %v458 = vpop.f32.mrf.mxu0
    %v459 = vadd.f32 0.0, %v458
    %v460 = vpop.f32.mrf.mxu0
    %461 = vmatprep.mubr.bf16.mxu0 0
    %462 = vmatmul.mubr.bf16.gmra.mxu0 %v398
    %v463 = vpop.f32.mrf.mxu0
    %v464 = vadd.f32 0.0, %v463
    %v465 = vpop.f32.mrf.mxu0
    %v466 = vpop.f32.mrf.mxu0
    %v467 = vadd.f32 0.0, %v466
    %v468 = vpop.f32.mrf.mxu0
    %469 = vmatprep.mubr.bf16.mxu0 0
    %470 = vmatmul.mubr.bf16.gmra.mxu0 %v401
    %v471 = vpop.f32.mrf.mxu0
    %v472 = vadd.f32 0.0, %v471
    %v473 = vpop.f32.mrf.mxu0
    %v474 = vpop.f32.mrf.mxu0
    %v475 = vadd.f32 0.0, %v474
    %v476 = vpop.f32.mrf.mxu0
    %477 = vmatprep.mubr.bf16.mxu0 0
    %478 = vmatmul.mubr.bf16.gmra.mxu0 %v404
    %v479 = vpop.f32.mrf.mxu0
    %v480 = vadd.f32 0.0, %v479
    %v481 = vpop.f32.mrf.mxu0
    %v482 = vpop.f32.mrf.mxu0
    %v483 = vadd.f32 0.0, %v482
    %v484 = vpop.f32.mrf.mxu0
    %485 = vmatprep.mubr.bf16.mxu0 0
    %486 = vmatmul.mubr.bf16.gmra.mxu0 %v407
    %v487 = vpop.f32.mrf.mxu0
    %v488 = vadd.f32 0.0, %v487
    %v489 = vpop.f32.mrf.mxu0
    %v490 = vpop.f32.mrf.mxu0
    %v491 = vpop.f32.mrf.mxu0
    %492 = vdwg.mxu0
    %v493 = vrcp.pop %v488
    %v494 = vlaneseq
    %v495 = vshrl.u32 %v494, 7
    %v496 = vsub.s32 0, %v495
    %v497 = vrot.slane %v493, %v496
    %v498 = vmul.f32 %v456, %v497
    %v499 = vmul.f32 %v459, %v497
    %v500 = vmul.f32 %v464, %v497
    %v501 = vmul.f32 %v467, %v497
    %v502 = vmul.f32 %v472, %v497
    %v503 = vmul.f32 %v475, %v497
    %v504 = vmul.f32 %v480, %v497
    %v505 = vmul.f32 %v483, %v497
    %v506 = vstv %s236
    %v507 = vmul.f32 %v506, %v498
    %v508 = vmul.f32 %v506, %v499
    %v509 = vmul.f32 %v506, %v500
    %v510 = vmul.f32 %v506, %v501
    %v511 = vmul.f32 %v506, %v502
    %v512 = vmul.f32 %v506, %v503
    %v513 = vmul.f32 %v506, %v504
    %v514 = vmul.f32 %v506, %v505
    %v515 = vadd.f32 %v507, %v20
    %v516 = vadd.f32 %v508, %v21
    %v517 = vadd.f32 %v509, %v22
    %v518 = vadd.f32 %v510, %v23
    %v519 = vadd.f32 %v511, %v24
    %v520 = vadd.f32 %v512, %v25
    %v521 = vadd.f32 %v513, %v26
    %v522 = vadd.f32 %v514, %v27
    %524 = vrot.lane.b32.xlu0 %v237, 64
    %v525 = vpop.permute.xlu0 %524
    %527 = vxpose.xlu0.c.b16.start [1/8] %v525, 128
    %528 = vxpose.xlu0.c.b16.cont [2/8] 0, 128
    %529 = vxpose.xlu0.c.b16.cont [3/8] 0, 128
    %530 = vxpose.xlu0.c.b16.cont [4/8] 0, 128
    %531 = vxpose.xlu0.c.b16.cont [5/8] 0, 128
    %532 = vxpose.xlu0.c.b16.cont [6/8] 0, 128
    %533 = vxpose.xlu0.c.b16.cont [7/8] 0, 128
    %534 = vxpose.xlu0.c.b16.end [8/8] 0, 128
    %v535 = vpop.trf.xlu0
    %v536 = vpop.trf.xlu0
    %v537 = vpop.trf.xlu0
    %v538 = vpop.trf.xlu0
    %v539 = vpop.trf.xlu0
    %v540 = vpop.trf.xlu0
    %v541 = vpop.trf.xlu0
    %v542 = vpop.trf.xlu0
    %544 = vrot.lane.b32.xlu0 %v238, 64
    %v545 = vpop.permute.xlu0 %544
    %v547 = vsel %vm260, %v535, 0
    %v550 = vsel %vm260, %v536, 0
    %v553 = vsel %vm260, %v537, 0
    %v556 = vsel %vm260, %v538, 0
    %v559 = vsel %vm273, %v545, 0
    %561 = vmatprep.subr.bf16.mxu0 0
    %562 = vmatpush1.bf16.msra.mxu0 0
    %563 = vmatprep.subr.bf16.mxu0 0
    %564 = vmatpush1.bf16.msra.mxu0 0
    %565 = vmatprep.subr.bf16.mxu0 0
    %566 = vmatpush1.bf16.msra.mxu0 0
    %567 = vmatprep.subr.bf16.mxu0 0
    %568 = vmatpush1.bf16.msra.mxu0 0
    %569 = vmatprep.subr.bf16.mxu0 0
    %570 = vmatpush1.bf16.msra.mxu0 0
    %571 = vmatprep.subr.bf16.mxu0 0
    %572 = vmatpush1.bf16.msra.mxu0 0
    %573 = vmatprep.subr.bf16.mxu0 0
    %574 = vmatpush1.bf16.msra.mxu0 0
    %575 = vmatprep.subr.bf16.mxu0 0
    %576 = vmatpush1.bf16.msra.mxu0 %v559
    %577 = vmatprep.subr.bf16.mxu0 0
    %578 = vmatpush2.bf16.msra.mxu0 0
    %579 = vmatprep.subr.bf16.mxu0 0
    %580 = vmatpush2.bf16.msra.mxu0 0
    %581 = vmatprep.subr.bf16.mxu0 0
    %582 = vmatpush2.bf16.msra.mxu0 0
    %583 = vmatprep.subr.bf16.mxu0 0
    %584 = vmatpush2.bf16.msra.mxu0 0
    %585 = vmatprep.subr.bf16.mxu0 0
    %586 = vmatpush2.bf16.msra.mxu0 0
    %587 = vmatprep.subr.bf16.mxu0 0
    %588 = vmatpush2.bf16.msra.mxu0 0
    %589 = vmatprep.subr.bf16.mxu0 0
    %590 = vmatpush2.bf16.msra.mxu0 0
    %591 = vmatprep.subr.bf16.mxu0 0
    %592 = vmatpush2.bf16.msra.mxu0 0
    %593 = vmatprep.mubr.bf16.mxu0 0
    %594 = vmatmul.mubr.bf16.gmra.mxu0 %v547
    %v595 = vpop.f32.mrf.mxu0
    %v596 = vadd.f32 0.0, %v595
    %v597 = vpop.f32.mrf.mxu0
    %v598 = vpop.f32.mrf.mxu0
    %v599 = vadd.f32 0.0, %v598
    %v600 = vpop.f32.mrf.mxu0
    %601 = vmatprep.mubr.bf16.mxu0 0
    %602 = vmatmul.mubr.bf16.gmra.mxu0 %v550
    %v603 = vpop.f32.mrf.mxu0
    %v604 = vadd.f32 0.0, %v603
    %v605 = vpop.f32.mrf.mxu0
    %v606 = vpop.f32.mrf.mxu0
    %v607 = vadd.f32 0.0, %v606
    %v608 = vpop.f32.mrf.mxu0
    %609 = vmatprep.mubr.bf16.mxu0 0
    %610 = vmatmul.mubr.bf16.gmra.mxu0 %v553
    %v611 = vpop.f32.mrf.mxu0
    %v612 = vadd.f32 0.0, %v611
    %v613 = vpop.f32.mrf.mxu0
    %v614 = vpop.f32.mrf.mxu0
    %v615 = vadd.f32 0.0, %v614
    %v616 = vpop.f32.mrf.mxu0
    %617 = vmatprep.mubr.bf16.mxu0 0
    %618 = vmatmul.mubr.bf16.gmra.mxu0 %v556
    %v619 = vpop.f32.mrf.mxu0
    %v620 = vadd.f32 0.0, %v619
    %v621 = vpop.f32.mrf.mxu0
    %v622 = vpop.f32.mrf.mxu0
    %v623 = vadd.f32 0.0, %v622
    %v624 = vpop.f32.mrf.mxu0
    %625 = vdwg.mxu0
    %v626 = vsel %vm137, %v596, -inf
    %627 = vmax.xlane.f32.xlu0 %v626
    %v628 = vpop.xlane.xlu0 %627
    %v629 = vsel %vm137, %v599, -inf
    %630 = vmax.xlane.f32.xlu0 %v629
    %v631 = vpop.xlane.xlu0 %630
    %v632 = vsel %vm137, %v604, -inf
    %633 = vmax.xlane.f32.xlu0 %v632
    %v634 = vpop.xlane.xlu0 %633
    %v635 = vsel %vm137, %v607, -inf
    %636 = vmax.xlane.f32.xlu0 %v635
    %v637 = vpop.xlane.xlu0 %636
    %v638 = vsel %vm137, %v612, -inf
    %639 = vmax.xlane.f32.xlu0 %v638
    %v640 = vpop.xlane.xlu0 %639
    %v641 = vsel %vm137, %v615, -inf
    %642 = vmax.xlane.f32.xlu0 %v641
    %v643 = vpop.xlane.xlu0 %642
    %v644 = vsel %vm137, %v620, -inf
    %645 = vmax.xlane.f32.xlu0 %v644
    %v646 = vpop.xlane.xlu0 %645
    %v647 = vsel %vm137, %v623, -inf
    %648 = vmax.xlane.f32.xlu0 %v647
    %v649 = vpop.xlane.xlu0 %648
    %v650 = vsub.f32 %v596, %v628
    %v651 = vsub.f32 %v599, %v631
    %v652 = vsub.f32 %v604, %v634
    %v653 = vsub.f32 %v607, %v637
    %v654 = vsub.f32 %v612, %v640
    %v655 = vsub.f32 %v615, %v643
    %v656 = vsub.f32 %v620, %v646
    %v657 = vsub.f32 %v623, %v649
    %v658 = vmul.f32 %v650, 1.442695
    %v659 = vpow.pop %v658
    %v660 = vmul.f32 %v651, 1.442695
    %v661 = vpow.pop %v660
    %v662 = vmul.f32 %v652, 1.442695
    %v663 = vpow.pop %v662
    %v664 = vmul.f32 %v653, 1.442695
    %v665 = vpow.pop %v664
    %v666 = vmul.f32 %v654, 1.442695
    %v667 = vpow.pop %v666
    %v668 = vmul.f32 %v655, 1.442695
    %v669 = vpow.pop %v668
    %v670 = vmul.f32 %v656, 1.442695
    %v671 = vpow.pop %v670
    %v672 = vmul.f32 %v657, 1.442695
    %v673 = vpow.pop %v672
    %v674 = vpack.c.bf16 %v661, %v659
    %v675 = vpack.c.bf16 %v665, %v663
    %v676 = vpack.c.bf16 %v669, %v667
    %v677 = vpack.c.bf16 %v673, %v671
    %683 = vrot.lane.b32.xlu0 %v239, 64
    %v684 = vpop.permute.xlu0 %683
    %685 = vrot.lane.b32.xlu0 %v240, 64
    %v686 = vpop.permute.xlu0 %685
    %687 = vrot.lane.b32.xlu0 %v241, 64
    %v688 = vpop.permute.xlu0 %687
    %689 = vrot.lane.b32.xlu0 %v242, 64
    %v690 = vpop.permute.xlu0 %689
    %691 = vrot.lane.b32.xlu0 %v243, 64
    %v692 = vpop.permute.xlu0 %691
    %v694 = vsel %vm137, %v684, 0
    %v697 = vsel %vm137, %v686, 0
    %v700 = vsel %vm137, %v688, 0
    %v703 = vsel %vm137, %v690, 0
    %v706 = vsel %vm137, %v692, 0
    %v709 = vsel %vm137, %v674, 0
    %v712 = vsel %vm137, %v675, 0
    %v715 = vsel %vm137, %v676, 0
    %v718 = vsel %vm137, %v677, 0
    %720 = vmatprep.subr.bf16.mxu0 0
    %721 = vmatpush1.bf16.xpose.msra.mxu0 0
    %722 = vmatprep.subr.bf16.mxu0 0
    %723 = vmatpush1.bf16.xpose.msra.mxu0 0
    %724 = vmatprep.subr.bf16.mxu0 0
    %725 = vmatpush1.bf16.xpose.msra.mxu0 0
    %726 = vmatprep.subr.bf16.mxu0 0
    %727 = vmatpush1.bf16.xpose.msra.mxu0 0
    %728 = vmatprep.subr.bf16.mxu0 0
    %729 = vmatpush1.bf16.xpose.msra.mxu0 %v718
    %730 = vmatprep.subr.bf16.mxu0 0
    %731 = vmatpush1.bf16.xpose.msra.mxu0 %v715
    %732 = vmatprep.subr.bf16.mxu0 0
    %733 = vmatpush1.bf16.xpose.msra.mxu0 %v712
    %734 = vmatprep.subr.bf16.mxu0 0
    %735 = vmatpush1.bf16.xpose.msra.mxu0 %v709
    %736 = vmatprep.subr.bf16.mxu0 0
    %737 = vmatpush2.bf16.xpose.msra.mxu0 0
    %738 = vmatprep.subr.bf16.mxu0 0
    %739 = vmatpush2.bf16.xpose.msra.mxu0 0
    %740 = vmatprep.subr.bf16.mxu0 0
    %741 = vmatpush2.bf16.xpose.msra.mxu0 0
    %742 = vmatprep.subr.bf16.mxu0 0
    %743 = vmatpush2.bf16.xpose.msra.mxu0 0
    %744 = vmatprep.subr.bf16.mxu0 0
    %745 = vmatpush2.bf16.xpose.msra.mxu0 0
    %746 = vmatprep.subr.bf16.mxu0 0
    %747 = vmatpush2.bf16.xpose.msra.mxu0 0
    %748 = vmatprep.subr.bf16.mxu0 0
    %749 = vmatpush2.bf16.xpose.msra.mxu0 0
    %750 = vmatprep.subr.bf16.mxu0 0
    %751 = vmatpush2.bf16.xpose.msra.mxu0 0
    %752 = vmatprep.mubr.bf16.mxu0 0
    %753 = vmatmul.mubr.bf16.gmra.mxu0 %v694
    %v754 = vpop.f32.mrf.mxu0
    %v755 = vadd.f32 0.0, %v754
    %v756 = vpop.f32.mrf.mxu0
    %v757 = vpop.f32.mrf.mxu0
    %v758 = vadd.f32 0.0, %v757
    %v759 = vpop.f32.mrf.mxu0
    %760 = vmatprep.mubr.bf16.mxu0 0
    %761 = vmatmul.mubr.bf16.gmra.mxu0 %v697
    %v762 = vpop.f32.mrf.mxu0
    %v763 = vadd.f32 0.0, %v762
    %v764 = vpop.f32.mrf.mxu0
    %v765 = vpop.f32.mrf.mxu0
    %v766 = vadd.f32 0.0, %v765
    %v767 = vpop.f32.mrf.mxu0
    %768 = vmatprep.mubr.bf16.mxu0 0
    %769 = vmatmul.mubr.bf16.gmra.mxu0 %v700
    %v770 = vpop.f32.mrf.mxu0
    %v771 = vadd.f32 0.0, %v770
    %v772 = vpop.f32.mrf.mxu0
    %v773 = vpop.f32.mrf.mxu0
    %v774 = vadd.f32 0.0, %v773
    %v775 = vpop.f32.mrf.mxu0
    %776 = vmatprep.mubr.bf16.mxu0 0
    %777 = vmatmul.mubr.bf16.gmra.mxu0 %v703
    %v778 = vpop.f32.mrf.mxu0
    %v779 = vadd.f32 0.0, %v778
    %v780 = vpop.f32.mrf.mxu0
    %v781 = vpop.f32.mrf.mxu0
    %v782 = vadd.f32 0.0, %v781
    %v783 = vpop.f32.mrf.mxu0
    %784 = vmatprep.mubr.bf16.mxu0 0
    %785 = vmatmul.mubr.bf16.gmra.mxu0 %v706
    %v786 = vpop.f32.mrf.mxu0
    %v787 = vadd.f32 0.0, %v786
    %v788 = vpop.f32.mrf.mxu0
    %v789 = vpop.f32.mrf.mxu0
    %v790 = vpop.f32.mrf.mxu0
    %791 = vdwg.mxu0
    %v792 = vrcp.pop %v787
    %v793 = vlaneseq
    %v794 = vshrl.u32 %v793, 7
    %v795 = vsub.s32 0, %v794
    %v796 = vrot.slane %v792, %v795
    %v797 = vmul.f32 %v755, %v796
    %v798 = vmul.f32 %v758, %v796
    %v799 = vmul.f32 %v763, %v796
    %v800 = vmul.f32 %v766, %v796
    %v801 = vmul.f32 %v771, %v796
    %v802 = vmul.f32 %v774, %v796
    %v803 = vmul.f32 %v779, %v796
    %v804 = vmul.f32 %v782, %v796
    %v805 = vmul.f32 %v506, %v797
    %v806 = vmul.f32 %v506, %v798
    %v807 = vmul.f32 %v506, %v799
    %v808 = vmul.f32 %v506, %v800
    %v809 = vmul.f32 %v506, %v801
    %v810 = vmul.f32 %v506, %v802
    %v811 = vmul.f32 %v506, %v803
    %v812 = vmul.f32 %v506, %v804
    %821 = vrot.lane.b32.xlu0 %v20, 64
    %v822 = vpop.permute.xlu0 %821
    %823 = vrot.lane.b32.xlu0 %v21, 64
    %v824 = vpop.permute.xlu0 %823
    %825 = vrot.lane.b32.xlu0 %v22, 64
    %v826 = vpop.permute.xlu0 %825
    %827 = vrot.lane.b32.xlu0 %v23, 64
    %v828 = vpop.permute.xlu0 %827
    %829 = vrot.lane.b32.xlu0 %v24, 64
    %v830 = vpop.permute.xlu0 %829
    %831 = vrot.lane.b32.xlu0 %v25, 64
    %v832 = vpop.permute.xlu0 %831
    %833 = vrot.lane.b32.xlu0 %v26, 64
    %v834 = vpop.permute.xlu0 %833
    %835 = vrot.lane.b32.xlu0 %v27, 64
    %v836 = vpop.permute.xlu0 %835
    %v845 = vadd.f32 %v805, %v822
    %v846 = vadd.f32 %v806, %v824
    %v847 = vadd.f32 %v807, %v826
    %v848 = vadd.f32 %v808, %v828
    %v849 = vadd.f32 %v809, %v830
    %v850 = vadd.f32 %v810, %v832
    %v851 = vadd.f32 %v811, %v834
    %v852 = vadd.f32 %v812, %v836
    %861 = vrot.lane.b32.xlu0 %v845, 64
    %v862 = vpop.permute.xlu0 %861
    %863 = vrot.lane.b32.xlu0 %v846, 64
    %v864 = vpop.permute.xlu0 %863
    %865 = vrot.lane.b32.xlu0 %v847, 64
    %v866 = vpop.permute.xlu0 %865
    %867 = vrot.lane.b32.xlu0 %v848, 64
    %v868 = vpop.permute.xlu0 %867
    %869 = vrot.lane.b32.xlu0 %v849, 64
    %v870 = vpop.permute.xlu0 %869
    %871 = vrot.lane.b32.xlu0 %v850, 64
    %v872 = vpop.permute.xlu0 %871
    %873 = vrot.lane.b32.xlu0 %v851, 64
    %v874 = vpop.permute.xlu0 %873
    %875 = vrot.lane.b32.xlu0 %v852, 64
    %v876 = vpop.permute.xlu0 %875
    %v885 = vsel %vm137, %v515, %v862
    %v886 = vsel %vm137, %v516, %v864
    %v887 = vsel %vm137, %v517, %v866
    %v888 = vsel %vm137, %v518, %v868
    %v889 = vsel %vm137, %v519, %v870
    %v890 = vsel %vm137, %v520, %v872
    %v891 = vsel %vm137, %v521, %v874
    %v892 = vsel %vm137, %v522, %v876
    %893 = vst [vmem:[#allocation3] sm:$0xff] %v885
    %894 = vst [vmem:[#allocation3 + $0x8] sm:$0xff] %v886
    %895 = vst [vmem:[#allocation3 + $0x10] sm:$0xff] %v887
    %896 = vst [vmem:[#allocation3 + $0x18] sm:$0xff] %v888
    %897 = vst [vmem:[#allocation3 + $0x20] sm:$0xff] %v889
    %898 = vst [vmem:[#allocation3 + $0x28] sm:$0xff] %v890
    %899 = vst [vmem:[#allocation3 + $0x30] sm:$0xff] %v891
    %900 = vst [vmem:[#allocation3 + $0x38] sm:$0xff] %v892
    // Predicated region
    $region18: #{tpu_custom_call.1} parent=1 // pred_check
      _
    $region19: #{tpu_custom_call.1} parent=1 // pred_check_branch
      %902 = sbr.rel (0) target = $region21
    $region20: #{tpu_custom_call.1} parent=1 // pred_region
      %s904 = ssub.s32 1024, 1024
      %905 = vsyncadd [#allocation4], %s904
      %s906 = sshll.u32 [#allocation3], 4
      %s907 = int_to_ptr.vmem [resolvable:$true] %s906
      %912 = dma.vmem_to_hbm [thread:$0]  %s907, 1024, %s4, [#allocation4], 128, 128, 8
    $region21: #{tpu_custom_call.1} parent=1 // pred_fallthru
      _
    // Predicated region
    $region22: #{tpu_custom_call.1} parent=1 // pred_check
      _
    $region23: #{tpu_custom_call.1} parent=1 // pred_check_branch
      %914 = sbr.rel (0) target = $region25
    $region24: #{tpu_custom_call.1} parent=1 // pred_region
      %915 = dma.done [#allocation4], 1024
    $region25: #{tpu_custom_call.1} parent=1 // pred_fallthru
      _
    %916 = vsyncpa [#allocation4], 1

</llo_original>
